<compile_context>
chip_gen: v7x
topology: tpu7x:2x2x1
jax: 0.10.0
libtpu: 0.0.40
codegen_flags: <defaults>
</compile_context>

<pallas_src>
import math

import jax
import jax.numpy as jnp
import numpy as np
from jax.experimental import pallas as pl
from jax.experimental.pallas import tpu as pltpu

BOOST_ACCEL = 0.18
ROCKET_DIAMETER = 0.05
ROCKET_HEIGHT = ROCKET_DIAMETER * 15
C_D = math.pi / 16.0 * ROCKET_HEIGHT * ROCKET_DIAMETER * 1.0
FRAME_TIME = 0.1
GRAVITY_ACCEL = 0.12

_LANES = 128
_SUBLANES = 8
# Rows (of 128 lanes) per grid step.  512 rows = 64K lanes per tile:
# double-buffered (2 + 5) * 4 B/lane * 64K * 2 ~= 3.7 MiB, comfortably inside
# the default scoped VMEM on v5e (16 MiB) and v6e/v7x (32 MiB).
_MAX_TILE_ROWS = 512
# Aim for at least this many grid steps on large batches so v7x's two
# TensorCores (dimension_semantics=("parallel",)) are both kept busy.
_MIN_TILES_LARGE = 4


def _round_up(x, m):
    return ((x + m - 1) // m) * m


def _dynamics_kernel(coef_ref, action_ref, out_ref):
    # coef_ref  : SMEM f32[10]         (alpha0..alpha4, beta0..beta4)
    # action_ref: VMEM f32[2, TS, 128] row 0 = thrust, row 1 = omega
    # out_ref   : VMEM f32[5, TS, 128]
    #
    #   out[k] = alpha_k + beta_k * thrust   (k = 0..3)
    #   out[4] = alpha_4 + beta_4 * omega
    #
    # All state-dependent scalars were folded in the wrapper; the body is
    # purely HBM-bound: 5 full-vreg FMAs + 5 unmasked full-vreg stores per
    # (TS,128) slab.
    a0 = action_ref[0]            # (TS, 128) thrust controller
    a1 = action_ref[1]            # (TS, 128) omega controller
    out_ref[0] = coef_ref[0] + coef_ref[5] * a0
    out_ref[1] = coef_ref[1] + coef_ref[6] * a0
    out_ref[2] = coef_ref[2] + coef_ref[7] * a0
    out_ref[3] = coef_ref[3] + coef_ref[8] * a0
    out_ref[4] = coef_ref[4] + coef_ref[9] * a1


@jax.jit
def dynamics_forward(state, action):
    """state: f32[5], action: f32[N, 2]  ->  f32[5, N] (== step_mat @ new_state.T)."""
    state = state.astype(jnp.float32)
    action = action.astype(jnp.float32)
    n = action.shape[0]

    # ---- scalar precompute: plain JAX on the 5 state scalars ----------------
    x, y, vx, vy, theta = state[0], state[1], state[2], state[3], state[4]
    sin_t = jnp.sin(theta)
    cos_t = jnp.cos(theta)
    bf = BOOST_ACCEL * FRAME_TIME
    d2 = -sin_t - C_D * vx * vx           # thrust coefficient of x_dot row
    d3 = cos_t - C_D * vy * vy            # thrust coefficient of y_dot row
    # new_state (pre step_mat):
    #   ns0 = x + bf*(-.5*FT*sin)*a0              ns2 = vx + bf*d2*a0
    #   ns1 = (y - G*FT) + bf*(.5*FT*cos)*a0      ns3 = vy + bf*d3*a0
    #   ns4 = theta + bf*(1/FT)*a1
    # step_mat fold: out0 = ns0 + FT*ns2, out1 = ns1 + FT*ns3, out2..4 = ns2..4
    alpha = jnp.stack([
        x + FRAME_TIME * vx,
        (y - GRAVITY_ACCEL * FRAME_TIME) + FRAME_TIME * vy,
        vx,
        vy,
        theta,
    ])
    beta = jnp.stack([
        bf * (-0.5 * FRAME_TIME * sin_t) + FRAME_TIME * bf * d2,
        bf * (0.5 * FRAME_TIME * cos_t) + FRAME_TIME * bf * d3,
        bf * d2,
        bf * d3,
        jnp.float32(BOOST_ACCEL),          # multiplies omega (= bf / FT)
    ])
    coef = jnp.concatenate([alpha, beta]).astype(jnp.float32)

    # ---- lane/sublane-dense tiling: batch packed into full (8,128) vregs ----
    s1 = _round_up(n, _SUBLANES * _LANES) // _LANES            # sublane rows
    ts = max(_SUBLANES,
             min(_MAX_TILE_ROWS,
                 _round_up(pl.cdiv(s1, _MIN_TILES_LARGE), _SUBLANES)))
    s_pad = _round_up(s1, ts)                                  # full blocks only
    n_pad = s_pad * _LANES
    num_tiles = s_pad // ts

    # Single fused copy: pad + transpose + reshape to (2, s_pad, 128).
    act = action
    if n_pad != n:
        act = jnp.pad(act, ((0, n_pad - n), (0, 0)))
    act3 = jnp.transpose(act).reshape(2, s_pad, _LANES)

    out3 = pl.pallas_call(
        _dynamics_kernel,
        out_shape=jax.ShapeDtypeStruct((5, s_pad, _LANES), jnp.float32),
        grid=(num_tiles,),
        in_specs=[
            pl.BlockSpec(memory_space=pltpu.MemorySpace.SMEM),     # coef scalars
            pl.BlockSpec((2, ts, _LANES), lambda i: (0, i, 0)),    # action slab
        ],
        out_specs=pl.BlockSpec((5, ts, _LANES), lambda i: (0, i, 0)),
        compiler_params=pltpu.CompilerParams(
            dimension_semantics=("parallel",)),
    )(coef, act3)

    out = out3.reshape(5, n_pad)                                # free reshape
    if n_pad != n:
        out = out[:, :n]                                        # only if ragged
    return out


def dynamics_ref(state, action):
    """Pure-JAX reference mirroring the PyTorch forward."""
    state = state.astype(jnp.float32)
    action = action.astype(jnp.float32)
    theta, vx, vy = state[4], state[2], state[3]
    st = jnp.zeros((5, 2), jnp.float32)
    st = st.at[0, 0].set(-0.5 * FRAME_TIME * jnp.sin(theta))
    st = st.at[1, 0].set(0.5 * FRAME_TIME * jnp.cos(theta))
    st = st.at[2, 0].set(-jnp.sin(theta) - C_D * vx ** 2)
    st = st.at[3, 0].set(jnp.cos(theta) - C_D * vy ** 2)
    st = st.at[4, 1].set(1.0 / FRAME_TIME)
    delta = BOOST_ACCEL * FRAME_TIME * (action @ st.T)
    grav = jnp.array([0.0, -GRAVITY_ACCEL * FRAME_TIME, 0.0, 0.0, 0.0],
                     jnp.float32)
    new_state = state + delta + grav
    step_mat = jnp.array(
        [[1.0, 0.0, FRAME_TIME, 0.0, 0.0],
         [0.0, 1.0, 0.0, FRAME_TIME, 0.0],
         [0.0, 0.0, 1.0, 0.0, 0.0],
         [0.0, 0.0, 0.0, 1.0, 0.0],
         [0.0, 0.0, 0.0, 0.0, 1.0]], dtype=jnp.float32)
    return step_mat @ new_state.T


if __name__ == "__main__":
    key = jax.random.PRNGKey(0)
    k1, k2, k3, k4 = jax.random.split(key, 4)
    state = jax.random.normal(k1, (5,), dtype=jnp.float32)      # [x, y, vx, vy, theta]

    # Module-sized case: batch of 2 actions.
    action = jax.random.normal(k2, (2, 2), dtype=jnp.float32)
    out = dynamics_forward(state, action)
    jax.block_until_ready(out)
    assert out.shape == (5, 2)
    np.testing.assert_allclose(np.asarray(out),
                               np.asarray(dynamics_ref(state, action)),
                               rtol=1e-5, atol=1e-5)

    # Ragged (pad + slice) path.
    action_rag = jax.random.normal(k3, (300, 2), dtype=jnp.float32)
    out_rag = dynamics_forward(state, action_rag)
    jax.block_until_ready(out_rag)
    assert out_rag.shape == (5, 300)
    np.testing.assert_allclose(np.asarray(out_rag),
                               np.asarray(dynamics_ref(state, action_rag)),
                               rtol=1e-5, atol=1e-5)

    # Tile-aligned multi-tile path (4 grid steps, no pad / no slice).
    action_big = jax.random.normal(k4, (4096, 2), dtype=jnp.float32)
    out_big = dynamics_forward(state, action_big)
    jax.block_until_ready(out_big)
    assert out_big.shape == (5, 4096)
    np.testing.assert_allclose(np.asarray(out_big),
                               np.asarray(dynamics_ref(state, action_big)),
                               rtol=1e-5, atol=1e-5)

    print("KERNEL_OK")
</pallas_src>

<mosaic_0001>
module attributes {stable_mosaic.version = 11 : i64} {
  func.func @_dynamics_kernel(%arg0: i32, %arg1: memref<10xf32, #tpu.memory_space<smem>>, %arg2: memref<2x8x128xf32, #tpu.memory_space<vmem>>, %arg3: memref<5x8x128xf32, #tpu.memory_space<vmem>>) attributes {dimension_semantics = [#tpu.dimension_semantics<parallel>], iteration_bounds = array<i64: 1>, scalar_prefetch = 0 : i64, scratch_operands = 0 : i64, tpu.core_type = #tpu.core_type<tc>, window_params = [{transform_indices = @transform_0, window_bounds = array<i64: 10>}, {transform_indices = @transform_1, window_bounds = array<i64: 2, 8, 128>}, {transform_indices = @transform_2, window_bounds = array<i64: 5, 8, 128>}]} {
    %c0 = arith.constant 0 : index
    %c0_0 = arith.constant 0 : index
    %c0_1 = arith.constant 0 : index
    %0 = vector.load %arg2[%c0, %c0_0, %c0_1] : memref<2x8x128xf32, #tpu.memory_space<vmem>>, vector<1x8x128xf32>
    %1 = vector.shape_cast %0 : vector<1x8x128xf32> to vector<8x128xf32>
    %c1 = arith.constant 1 : index
    %c0_2 = arith.constant 0 : index
    %c0_3 = arith.constant 0 : index
    %2 = vector.load %arg2[%c1, %c0_2, %c0_3] : memref<2x8x128xf32, #tpu.memory_space<vmem>>, vector<1x8x128xf32>
    %3 = vector.shape_cast %2 : vector<1x8x128xf32> to vector<8x128xf32>
    %c0_4 = arith.constant 0 : index
    %4 = memref.load %arg1[%c0_4] : memref<10xf32, #tpu.memory_space<smem>>
    %c5 = arith.constant 5 : index
    %5 = memref.load %arg1[%c5] : memref<10xf32, #tpu.memory_space<smem>>
    %6 = vector.broadcast %5 : f32 to vector<8x128xf32>
    %7 = arith.mulf %6, %1 : vector<8x128xf32>
    %8 = vector.broadcast %4 : f32 to vector<8x128xf32>
    %9 = arith.addf %8, %7 : vector<8x128xf32>
    %c0_5 = arith.constant 0 : index
    %c0_6 = arith.constant 0 : index
    %c0_7 = arith.constant 0 : index
    %10 = vector.load %arg3[%c0_5, %c0_6, %c0_7] : memref<5x8x128xf32, #tpu.memory_space<vmem>>, vector<1x8x128xf32>
    %11 = vector.shape_cast %10 : vector<1x8x128xf32> to vector<8x128xf32>
    %12 = vector.shape_cast %9 : vector<8x128xf32> to vector<1x8x128xf32>
    tpu.vector_store %arg3[%c0_5, %c0_6, %c0_7], %12 {strides = array<i32>} : memref<5x8x128xf32, #tpu.memory_space<vmem>>, vector<1x8x128xf32>,
    %c1_8 = arith.constant 1 : index
    %13 = memref.load %arg1[%c1_8] : memref<10xf32, #tpu.memory_space<smem>>
    %c6 = arith.constant 6 : index
    %14 = memref.load %arg1[%c6] : memref<10xf32, #tpu.memory_space<smem>>
    %15 = vector.broadcast %14 : f32 to vector<8x128xf32>
    %16 = arith.mulf %15, %1 : vector<8x128xf32>
    %17 = vector.broadcast %13 : f32 to vector<8x128xf32>
    %18 = arith.addf %17, %16 : vector<8x128xf32>
    %c1_9 = arith.constant 1 : index
    %c0_10 = arith.constant 0 : index
    %c0_11 = arith.constant 0 : index
    %19 = vector.load %arg3[%c1_9, %c0_10, %c0_11] : memref<5x8x128xf32, #tpu.memory_space<vmem>>, vector<1x8x128xf32>
    %20 = vector.shape_cast %19 : vector<1x8x128xf32> to vector<8x128xf32>
    %21 = vector.shape_cast %18 : vector<8x128xf32> to vector<1x8x128xf32>
    tpu.vector_store %arg3[%c1_9, %c0_10, %c0_11], %21 {strides = array<i32>} : memref<5x8x128xf32, #tpu.memory_space<vmem>>, vector<1x8x128xf32>,
    %c2 = arith.constant 2 : index
    %22 = memref.load %arg1[%c2] : memref<10xf32, #tpu.memory_space<smem>>
    %c7 = arith.constant 7 : index
    %23 = memref.load %arg1[%c7] : memref<10xf32, #tpu.memory_space<smem>>
    %24 = vector.broadcast %23 : f32 to vector<8x128xf32>
    %25 = arith.mulf %24, %1 : vector<8x128xf32>
    %26 = vector.broadcast %22 : f32 to vector<8x128xf32>
    %27 = arith.addf %26, %25 : vector<8x128xf32>
    %c2_12 = arith.constant 2 : index
    %c0_13 = arith.constant 0 : index
    %c0_14 = arith.constant 0 : index
    %28 = vector.load %arg3[%c2_12, %c0_13, %c0_14] : memref<5x8x128xf32, #tpu.memory_space<vmem>>, vector<1x8x128xf32>
    %29 = vector.shape_cast %28 : vector<1x8x128xf32> to vector<8x128xf32>
    %30 = vector.shape_cast %27 : vector<8x128xf32> to vector<1x8x128xf32>
    tpu.vector_store %arg3[%c2_12, %c0_13, %c0_14], %30 {strides = array<i32>} : memref<5x8x128xf32, #tpu.memory_space<vmem>>, vector<1x8x128xf32>,
    %c3 = arith.constant 3 : index
    %31 = memref.load %arg1[%c3] : memref<10xf32, #tpu.memory_space<smem>>
    %c8 = arith.constant 8 : index
    %32 = memref.load %arg1[%c8] : memref<10xf32, #tpu.memory_space<smem>>
    %33 = vector.broadcast %32 : f32 to vector<8x128xf32>
    %34 = arith.mulf %33, %1 : vector<8x128xf32>
    %35 = vector.broadcast %31 : f32 to vector<8x128xf32>
    %36 = arith.addf %35, %34 : vector<8x128xf32>
    %c3_15 = arith.constant 3 : index
    %c0_16 = arith.constant 0 : index
    %c0_17 = arith.constant 0 : index
    %37 = vector.load %arg3[%c3_15, %c0_16, %c0_17] : memref<5x8x128xf32, #tpu.memory_space<vmem>>, vector<1x8x128xf32>
    %38 = vector.shape_cast %37 : vector<1x8x128xf32> to vector<8x128xf32>
    %39 = vector.shape_cast %36 : vector<8x128xf32> to vector<1x8x128xf32>
    tpu.vector_store %arg3[%c3_15, %c0_16, %c0_17], %39 {strides = array<i32>} : memref<5x8x128xf32, #tpu.memory_space<vmem>>, vector<1x8x128xf32>,
    %c4 = arith.constant 4 : index
    %40 = memref.load %arg1[%c4] : memref<10xf32, #tpu.memory_space<smem>>
    %c9 = arith.constant 9 : index
    %41 = memref.load %arg1[%c9] : memref<10xf32, #tpu.memory_space<smem>>
    %42 = vector.broadcast %41 : f32 to vector<8x128xf32>
    %43 = arith.mulf %42, %3 : vector<8x128xf32>
    %44 = vector.broadcast %40 : f32 to vector<8x128xf32>
    %45 = arith.addf %44, %43 : vector<8x128xf32>
    %c4_18 = arith.constant 4 : index
    %c0_19 = arith.constant 0 : index
    %c0_20 = arith.constant 0 : index
    %46 = vector.load %arg3[%c4_18, %c0_19, %c0_20] : memref<5x8x128xf32, #tpu.memory_space<vmem>>, vector<1x8x128xf32>
    %47 = vector.shape_cast %46 : vector<1x8x128xf32> to vector<8x128xf32>
    %48 = vector.shape_cast %45 : vector<8x128xf32> to vector<1x8x128xf32>
    tpu.vector_store %arg3[%c4_18, %c0_19, %c0_20], %48 {strides = array<i32>} : memref<5x8x128xf32, #tpu.memory_space<vmem>>, vector<1x8x128xf32>,
    return
  }
  func.func @transform_0(%arg0: i32) -> i32 {
    %c0_i32 = arith.constant 0 : i32
    %c0_i32_0 = arith.constant 0 : i32
    return %c0_i32 : i32
  }
  func.func @transform_1(%arg0: i32) -> (i32, i32, i32) {
    %c0_i32 = arith.constant 0 : i32
    %c0_i32_0 = arith.constant 0 : i32
    %c0_i32_1 = arith.constant 0 : i32
    return %c0_i32, %arg0, %c0_i32_0 : i32, i32, i32
  }
  func.func @transform_2(%arg0: i32) -> (i32, i32, i32) {
    %c0_i32 = arith.constant 0 : i32
    %c0_i32_0 = arith.constant 0 : i32
    %c0_i32_1 = arith.constant 0 : i32
    return %c0_i32, %arg0, %c0_i32_0 : i32, i32, i32
  }
}

</mosaic_0001>

<llo_original>
// kernel: dynamics_forward.1
$region0: #{dynamics_forward.1}
  #allocation0 [shape = 'u32[]', space=smem, size = 0x4, offset = 0x4, fixed_abs, tag = 'smem constant byte address 0x4 - core index']
  #allocation1 [shape = 'u32[144,128]{1,0:T(1,128)}', space=vmem, size = 0x12000, scoped, tag = 'internal scratch']
  %s0 = inlined_call_operand.vmem [shape: f32[10], index: 0, kind: input, shape index: {}]
  %s1 = inlined_call_operand.vmem [shape: f32[2,8,128], index: 1, kind: input, shape index: {}]
  %s2 = inlined_call_operand.vmem [shape: f32[5,8,128], index: 2, kind: output, shape index: {}]
  %s3 = sld [smem:[#allocation0]]
  $region22: #{dynamics_forward.1} parent=0
    _
  %s5 = ssub.s32 1, %s3
  %s6 = scalar_select 0, %s5, %s3
  $region1: #{dynamics_forward.1} parent=0
    #allocation2 [shape = 'u8[512]{0}', space=smem, size = 0x200, scoped, tag = 'input window, operand 0, single buffered']
    #allocation3 [shape = 's32[1]{0}', space=sflag, size = 0x4, scoped, tag = 'scoped memory for dynamics_forward.1']
    %7 = vsyncpa [#allocation3], 0
    // Predicated region
    $region2: #{dynamics_forward.1} parent=1 // pred_check
      _
    $region3: #{dynamics_forward.1} parent=1 // pred_check_branch
      %9 = sbr.rel (0) target = $region5
    $region4: #{dynamics_forward.1} parent=1 // pred_region
      %s11 = ssub.s32 16, 16
      %12 = vsyncadd [#allocation3], %s11
      %s14 = sshll.u32 %s0, 4
      %s15 = int_to_ptr.vmem [resolvable:$true] %s14
      %17 = dma.vmem_to_smem %s15, 16, [#allocation2], [#allocation3]
    $region5: #{dynamics_forward.1} parent=1 // pred_fallthru
      _
    // Predicated region
    $region6: #{dynamics_forward.1} parent=1 // pred_check
      _
    $region7: #{dynamics_forward.1} parent=1 // pred_check_branch
      %19 = sbr.rel (0) target = $region9
    $region8: #{dynamics_forward.1} parent=1 // pred_region
      _
    $region9: #{dynamics_forward.1} parent=1 // pred_fallthru
      _
    // Predicated region
    $region10: #{dynamics_forward.1} parent=1 // pred_check
      _
    $region11: #{dynamics_forward.1} parent=1 // pred_check_branch
      %21 = sbr.rel (0) target = $region13
    $region12: #{dynamics_forward.1} parent=1 // pred_region
      %22 = dma.done [#allocation3], 16
    $region13: #{dynamics_forward.1} parent=1 // pred_fallthru
      _
    %23 = sfence
    %v24 = vld [vmem:[%s1] sm:$0xff]
    %s25 = scalar_lea.vmem %s1, 8
    %v26 = vld [vmem:[%s25] sm:$0xff]
    %s27 = sld [smem:[#allocation2]]
    %s28 = sld [smem:[#allocation2 + $0x5]]
    %v29 = vstv %s28
    %v30 = vmul.f32 %v29, %v24
    %v31 = vstv %s27
    %v32 = vadd.f32 %v31, %v30
    %33 = vst [vmem:[%s2] sm:$0xff] %v32
    %s34 = sld [smem:[#allocation2 + $0x1]]
    %s35 = sld [smem:[#allocation2 + $0x6]]
    %v36 = vstv %s35
    %v37 = vmul.f32 %v36, %v24
    %v38 = vstv %s34
    %v39 = vadd.f32 %v38, %v37
    %s40 = scalar_lea.vmem %s2, 8
    %41 = vst [vmem:[%s40] sm:$0xff] %v39
    %s42 = sld [smem:[#allocation2 + $0x2]]
    %s43 = sld [smem:[#allocation2 + $0x7]]
    %v44 = vstv %s43
    %v45 = vmul.f32 %v44, %v24
    %v46 = vstv %s42
    %v47 = vadd.f32 %v46, %v45
    %s48 = scalar_lea.vmem %s2, 16
    %49 = vst [vmem:[%s48] sm:$0xff] %v47
    %s50 = sld [smem:[#allocation2 + $0x3]]
    %s51 = sld [smem:[#allocation2 + $0x8]]
    %v52 = vstv %s51
    %v53 = vmul.f32 %v52, %v24
    %v54 = vstv %s50
    %v55 = vadd.f32 %v54, %v53
    %s56 = scalar_lea.vmem %s2, 24
    %57 = vst [vmem:[%s56] sm:$0xff] %v55
    %s58 = sld [smem:[#allocation2 + $0x4]]
    %s59 = sld [smem:[#allocation2 + $0x9]]
    %v60 = vstv %s59
    %v61 = vmul.f32 %v60, %v26
    %v62 = vstv %s58
    %v63 = vadd.f32 %v62, %v61
    %s64 = scalar_lea.vmem %s2, 32
    %65 = vst [vmem:[%s64] sm:$0xff] %v63
    // Predicated region
    $region14: #{dynamics_forward.1} parent=1 // pred_check
      _
    $region15: #{dynamics_forward.1} parent=1 // pred_check_branch
      %67 = sbr.rel (0) target = $region17
    $region16: #{dynamics_forward.1} parent=1 // pred_region
      _
    $region17: #{dynamics_forward.1} parent=1 // pred_fallthru
      _
    // Predicated region
    $region18: #{dynamics_forward.1} parent=1 // pred_check
      _
    $region19: #{dynamics_forward.1} parent=1 // pred_check_branch
      %69 = sbr.rel (0) target = $region21
    $region20: #{dynamics_forward.1} parent=1 // pred_region
      _
    $region21: #{dynamics_forward.1} parent=1 // pred_fallthru
      _
    %70 = vsyncpa [#allocation3], 1

</llo_original>
